<compile_context>
chip_gen: v7x
topology: tpu7x:2x2x1
jax: 0.10.0
libtpu: 0.0.40
codegen_flags: <defaults>
</compile_context>

<pallas_src>
import functools

import jax
import jax.numpy as jnp
from jax import lax
from jax.experimental import pallas as pl
from jax.experimental.pallas import tpu as pltpu


# --------------------------------------------------------------------------- kernel


def _soft_target_ce_kernel(x_ref, t_ref, o_ref, *, n_rows_true, block_rows,
                           chunk_rows, mask_rows):
    ci = pl.program_id(0)            # core-split axis ("parallel")
    ii = pl.program_id(1)            # row-block reduction axis ("arbitrary")
    steps = pl.num_programs(1)

    @pl.when(ii == 0)
    def _():
        o_ref[...] = jnp.zeros_like(o_ref)

    row0 = (ci * steps + ii) * block_rows        # global row of this block's first row
    n_chunks = block_rows // chunk_rows          # chunk_rows divides block_rows (wrapper)

    def _reduce(p):
        # collapse row groups with plain VPU adds into the resident (8, C) accumulator;
        # the single tiny cross-lane reduce + batch mean happen in the wrapper.
        if chunk_rows % 8 == 0 and chunk_rows > 8:
            return p.reshape(chunk_rows // 8, 8, p.shape[-1]).sum(axis=0)
        return p

    @pl.loop(0, n_chunks)
    def _(s):
        r = pl.multiple_of(s * chunk_rows, chunk_rows)
        x = x_ref[pl.ds(r, chunk_rows), :].astype(jnp.float32)    # (chunk, C)
        t = t_ref[pl.ds(r, chunk_rows), :].astype(jnp.float32)    # (chunk, C)

        # fused, numerically stable:  -t * log_softmax(x) == t * (lse - (x - m))
        m = jnp.max(x, axis=-1, keepdims=True)
        z = x - m
        lse = jnp.log(jnp.sum(jnp.exp(z), axis=-1, keepdims=True))
        prod = t * (lse - z)                                       # (chunk, C)

        if mask_rows:
            chunk_row0 = row0 + r
            full = chunk_row0 + chunk_rows <= n_rows_true

            @pl.when(full)                       # common path: no select per element
            def _():
                o_ref[...] += _reduce(prod)

            @pl.when(jnp.logical_not(full))      # tail / over-provisioned chunk only
            def _():
                row_ids = chunk_row0 + lax.broadcasted_iota(
                    jnp.int32, (chunk_rows, 1), 0)
                # mask applied to the product (NaN-safe for unspecified OOB rows)
                o_ref[...] += _reduce(jnp.where(row_ids < n_rows_true, prod, 0.0))
        else:
            o_ref[...] += _reduce(prod)


# --------------------------------------------------------------------------- helpers


def _round_down8(v):
    return max(8, (v // 8) * 8)


def _num_tensorcores_per_chip():
    """2 on megacore (v4/v5p) and v7x; 1 on v5e/v6e; safe default 1."""
    try:
        kind = jax.devices()[0].device_kind.lower()
    except Exception:
        return 1
    if ("v4" in kind) or ("v5p" in kind) or ("v7" in kind) or ("7x" in kind):
        return 2
    return 1


def _vmem_capacity_bytes():
    try:
        return int(pltpu.get_tpu_info().vmem_capacity_bytes)
    except Exception:
        return 64 * 1024 * 1024          # conservative: v7x per-TensorCore figure


def _pick_chunk_rows(tm, target):
    """Largest multiple of 8 <= target that divides tm (or tm itself if small/odd)."""
    if tm <= target or tm % 8 != 0:
        return tm
    d = (target // 8) * 8
    while d >= 8:
        if tm % d == 0:
            return d
        d -= 8
    return tm


# --------------------------------------------------------------------------- wrapper


def soft_target_cross_entropy(x, target, *, block_rows=None, chunk_rows=None):
    """x: (N_rep, C) logits; target: (N, C) soft labels with N dividing N_rep."""
    n_rep, c = x.shape
    n, c_t = target.shape
    assert c == c_t, "class dims must match"

    # --- compute-chunk size: ~1 MiB of f32 rows (bounds in-kernel f32 temporaries) ---
    if chunk_rows is not None:
        chunk_target = max(1, int(chunk_rows))
    else:
        chunk_target = max(8, min(2048, ((1 << 20) // (4 * c) // 8) * 8))

    # --- VMEM budget (per generation) -> largest row tile that fits double-buffered ---
    vmem_cap = _vmem_capacity_bytes()
    total_budget = int(vmem_cap * 0.6)                       # headroom for scratch/output
    per_row_db = 2 * c * (x.dtype.itemsize + target.dtype.itemsize)   # x2 double buffer
    temp_bytes = 5 * chunk_target * c * 4                    # f32 temps of one chunk
    out_bytes = 2 * 8 * c * 4
    avail = max(total_budget - temp_bytes - out_bytes - (2 << 20), 8 * per_row_db)
    tm_cap = max(8, (avail // per_row_db) // 8 * 8)
    tm_raw = tm_cap if block_rows is None else max(1, int(block_rows))

    # --- base row tile (multiple of 8; aligned to chunk size when large) ---
    if n_rep < 8:
        tm = n_rep                                            # single full-array block
    else:
        tm = min(tm_raw, n_rep)
        if tm >= chunk_target and chunk_target % 8 == 0:
            tm = (tm // chunk_target) * chunk_target
        else:
            tm = _round_down8(tm)

    # --- torch: target.repeat(N_rep // N, 1) via modular index_map (no HBM copy) ---
    use_modular_target = False
    if n != n_rep:
        d = min(tm, n)
        d -= d % 8
        while d >= 8 and n % d:
            d -= 8
        if d >= 8:
            tm = d
            use_modular_target = True
        else:
            target = jnp.tile(target, (n_rep // n, 1))        # rare tiny-N fallback
            n = n_rep

    chunk = _pick_chunk_rows(tm, chunk_target)

    nblocks_x = pl.cdiv(n_rep, tm)
    nblocks_t = (n // tm) if use_modular_target else nblocks_x

    # row range across TensorCores only on multi-TC chips (v4/v5p megacore, v7x)
    grid_c = 2 if (_num_tensorcores_per_chip() >= 2 and nblocks_x >= 2) else 1
    steps = pl.cdiv(nblocks_x, grid_c)
    grid = (grid_c, steps)

    # tail rows / over-provisioned blocks masked in-kernel (no HBM padding copies)
    mask_rows = (nblocks_x * tm != n_rep) or (grid_c * steps != nblocks_x)

    def x_index_map(ci, ii):
        b = ci * steps + ii
        return (jnp.minimum(b, nblocks_x - 1), 0)     # clamp over-provisioned (masked)

    if use_modular_target:
        def t_index_map(ci, ii):
            b = jnp.minimum(ci * steps + ii, nblocks_x - 1)   # clamp first -> dedup DMA
            return (b % nblocks_t, 0)
    else:
        t_index_map = x_index_map

    acc_rows = 8 if tm % 8 == 0 else tm               # lane-dense per-core partial block

    kernel = functools.partial(
        _soft_target_ce_kernel,
        n_rows_true=n_rep,
        block_rows=tm,
        chunk_rows=chunk,
        mask_rows=mask_rows,
    )

    footprint = (2 * tm * c * (x.dtype.itemsize + target.dtype.itemsize)
                 + 5 * chunk * c * 4
                 + 2 * acc_rows * c * 4
                 + (2 << 20))
    vmem_limit = min(max(footprint, 16 << 20), max(vmem_cap - (4 << 20), 16 << 20))

    cost = pl.CostEstimate(
        flops=int(6 * n_rep * c),
        transcendentals=int(n_rep * c + n_rep),
        bytes_accessed=int(n_rep * c * (x.dtype.itemsize + target.dtype.itemsize)
                           + grid_c * acc_rows * c * 4),
    )

    partials = pl.pallas_call(
        kernel,
        out_shape=jax.ShapeDtypeStruct((grid_c * acc_rows, c), jnp.float32),
        grid_spec=pltpu.PrefetchScalarGridSpec(
            num_scalar_prefetch=0,
            grid=grid,
            in_specs=[
                pl.BlockSpec((tm, c), x_index_map),
                pl.BlockSpec((tm, c), t_index_map),
            ],
            out_specs=pl.BlockSpec((acc_rows, c), lambda ci, ii: (ci, 0)),
        ),
        compiler_params=pltpu.CompilerParams(
            dimension_semantics=("parallel", "arbitrary"),
            vmem_limit_bytes=int(vmem_limit),
        ),
        cost_estimate=cost,
    )(x, target)

    # tiny final reduction (<= 16 x C f32) + batch mean
    return jnp.sum(partials) / jnp.float32(n_rep)


# --------------------------------------------------------------------------- reference / test


def _reference(x, target):
    n_rep = x.shape[0]
    n = target.shape[0]
    if n != n_rep:
        target = jnp.tile(target, (n_rep // n, 1))
    logp = jax.nn.log_softmax(x.astype(jnp.float32), axis=-1)
    loss = jnp.sum(-target.astype(jnp.float32) * logp, axis=-1)
    return jnp.mean(loss)


if __name__ == "__main__":
    key = jax.random.PRNGKey(0)
    k1, k2, k3, k4, k5, k6 = jax.random.split(key, 6)

    # case 1: plain (N == N_rep)
    N, C = 8, 32
    x = jax.random.normal(k1, (N, C), dtype=jnp.float32)
    target = jax.nn.softmax(jax.random.normal(k2, (N, C), dtype=jnp.float32), axis=-1)
    loss = jax.block_until_ready(soft_target_cross_entropy(x, target))
    ref = _reference(x, target)
    assert jnp.allclose(loss, ref, rtol=1e-5, atol=1e-5), (loss, ref)

    # case 2: target-repeat branch (N_rep = 2 * N), handled via modular index_map
    x2 = jnp.concatenate([x, x * 0.5], axis=0)
    loss2 = jax.block_until_ready(soft_target_cross_entropy(x2, target))
    ref2 = _reference(x2, target)
    assert jnp.allclose(loss2, ref2, rtol=1e-5, atol=1e-5), (loss2, ref2)

    # case 3: non-divisible batch + small explicit block -> tail masking (pl.when path)
    x3 = jax.random.normal(k3, (20, C), dtype=jnp.float32)
    t3 = jax.nn.softmax(jax.random.normal(k4, (20, C), dtype=jnp.float32), axis=-1)
    loss3 = jax.block_until_ready(soft_target_cross_entropy(x3, t3, block_rows=8))
    ref3 = _reference(x3, t3)
    assert jnp.allclose(loss3, ref3, rtol=1e-5, atol=1e-5), (loss3, ref3)

    # case 4: repeat with multiple blocks per target (modular index_map wraps around)
    t4 = jax.nn.softmax(jax.random.normal(k2, (16, C), dtype=jnp.float32), axis=-1)
    x4 = jax.random.normal(k1, (32, C), dtype=jnp.float32)
    loss4 = jax.block_until_ready(soft_target_cross_entropy(x4, t4, block_rows=8))
    ref4 = _reference(x4, t4)
    assert jnp.allclose(loss4, ref4, rtol=1e-5, atol=1e-5), (loss4, ref4)

    # case 5: multi-chunk compute loop inside one DMA block (pl.loop path)
    x5 = jax.random.normal(k5, (64, C), dtype=jnp.float32)
    t5 = jax.nn.softmax(jax.random.normal(k6, (64, C), dtype=jnp.float32), axis=-1)
    loss5 = jax.block_until_ready(
        soft_target_cross_entropy(x5, t5, block_rows=64, chunk_rows=16))
    ref5 = _reference(x5, t5)
    assert jnp.allclose(loss5, ref5, rtol=1e-5, atol=1e-5), (loss5, ref5)

    print("KERNEL_OK")
</pallas_src>

<mosaic_0001>
module attributes {stable_mosaic.version = 11 : i64} {
  func.func @_soft_target_ce_kernel(%arg0: i32, %arg1: i32, %arg2: memref<8x32xf32, #tpu.memory_space<vmem>>, %arg3: memref<8x32xf32, #tpu.memory_space<vmem>>, %arg4: memref<8x32xf32, #tpu.memory_space<vmem>>) attributes {dimension_semantics = [#tpu.dimension_semantics<parallel>, #tpu.dimension_semantics<arbitrary>], iteration_bounds = array<i64: 1, 1>, scalar_prefetch = 0 : i64, scratch_operands = 0 : i64, tpu.core_type = #tpu.core_type<tc>, window_params = [{transform_indices = @transform_0, window_bounds = array<i64: 8, 32>}, {transform_indices = @transform_1, window_bounds = array<i64: 8, 32>}, {transform_indices = @transform_2, window_bounds = array<i64: 8, 32>}]} {
    %c0_i32 = arith.constant 0 : i32
    %0 = arith.cmpi eq, %arg1, %c0_i32 : i32
    %1 = arith.extui %0 : i1 to i32
    %c0_i32_0 = arith.constant 0 : i32
    %2 = arith.cmpi ne, %1, %c0_i32_0 : i32
    scf.if %2 {
      %cst_10 = arith.constant 0.000000e+00 : f32
      %25 = vector.broadcast %cst_10 : f32 to vector<8x32xf32>
      %c0_11 = arith.constant 0 : index
      %c0_12 = arith.constant 0 : index
      %26 = vector.load %arg4[%c0_11, %c0_12] : memref<8x32xf32, #tpu.memory_space<vmem>>, vector<8x32xf32>
      tpu.vector_store %arg4[%c0_11, %c0_12], %25 {strides = array<i32>} : memref<8x32xf32, #tpu.memory_space<vmem>>, vector<8x32xf32>,
    } else {
    }
    %c0_i32_1 = arith.constant 0 : i32
    %c1_i32 = arith.constant 1 : i32
    %3 = arith.muli %c0_i32_1, %c1_i32 : i32
    %c0_i32_2 = arith.constant 0 : i32
    %4 = arith.addi %c0_i32_2, %3 : i32
    %c8_i32 = arith.constant 8 : i32
    %5 = arith.muli %4, %c8_i32 : i32
    %6 = tpu.assume_multiple %5, 8 : i32
    %7 = arith.index_cast %6 : i32 to index
    %c0 = arith.constant 0 : index
    %8 = vector.load %arg2[%7, %c0] : memref<8x32xf32, #tpu.memory_space<vmem>>, vector<8x32xf32>
    %9 = arith.index_cast %6 : i32 to index
    %c0_3 = arith.constant 0 : index
    %10 = vector.load %arg3[%9, %c0_3] : memref<8x32xf32, #tpu.memory_space<vmem>>, vector<8x32xf32>
    %cst = arith.constant dense<0xFF800000> : vector<8xf32>
    %11 = vector.multi_reduction <maximumf>, %8, %cst [1] : vector<8x32xf32> to vector<8xf32>
    %12 = vector.shape_cast %11 : vector<8xf32> to vector<8x1xf32>
    %13 = vector.broadcast %12 : vector<8x1xf32> to vector<8x32xf32>
    %14 = arith.subf %8, %13 : vector<8x32xf32>
    %15 = math.exp %14 : vector<8x32xf32>
    %cst_4 = arith.constant dense<0.000000e+00> : vector<8xf32>
    %16 = vector.multi_reduction <add>, %15, %cst_4 [1] : vector<8x32xf32> to vector<8xf32>
    %17 = vector.shape_cast %16 : vector<8xf32> to vector<8x1xf32>
    %18 = math.log %17 : vector<8x1xf32>
    %19 = vector.broadcast %18 : vector<8x1xf32> to vector<8x32xf32>
    %20 = arith.subf %19, %14 : vector<8x32xf32>
    %21 = arith.mulf %10, %20 : vector<8x32xf32>
    %c0_5 = arith.constant 0 : index
    %c0_6 = arith.constant 0 : index
    %22 = vector.load %arg4[%c0_5, %c0_6] : memref<8x32xf32, #tpu.memory_space<vmem>>, vector<8x32xf32>
    %23 = arith.addf %22, %21 : vector<8x32xf32>
    %c0_7 = arith.constant 0 : index
    %c0_8 = arith.constant 0 : index
    %24 = vector.load %arg4[%c0_7, %c0_8] : memref<8x32xf32, #tpu.memory_space<vmem>>, vector<8x32xf32>
    tpu.vector_store %arg4[%c0_7, %c0_8], %23 {strides = array<i32>} : memref<8x32xf32, #tpu.memory_space<vmem>>, vector<8x32xf32>,
    %c1_i32_9 = arith.constant 1 : i32
    return
  }
  func.func @transform_0(%arg0: i32, %arg1: i32) -> (i32, i32) {
    %c1_i32 = arith.constant 1 : i32
    %0 = arith.muli %arg0, %c1_i32 : i32
    %1 = arith.addi %0, %arg1 : i32
    %c0_i32 = arith.constant 0 : i32
    %2 = arith.minsi %1, %c0_i32 : i32
    %c0_i32_0 = arith.constant 0 : i32
    %c0_i32_1 = arith.constant 0 : i32
    return %2, %c0_i32_0 : i32, i32
  }
  func.func @transform_1(%arg0: i32, %arg1: i32) -> (i32, i32) {
    %c1_i32 = arith.constant 1 : i32
    %0 = arith.muli %arg0, %c1_i32 : i32
    %1 = arith.addi %0, %arg1 : i32
    %c0_i32 = arith.constant 0 : i32
    %2 = arith.minsi %1, %c0_i32 : i32
    %c0_i32_0 = arith.constant 0 : i32
    %c0_i32_1 = arith.constant 0 : i32
    return %2, %c0_i32_0 : i32, i32
  }
  func.func @transform_2(%arg0: i32, %arg1: i32) -> (i32, i32) {
    %c0_i32 = arith.constant 0 : i32
    %c0_i32_0 = arith.constant 0 : i32
    return %arg0, %c0_i32 : i32, i32
  }
}

</mosaic_0001>

<llo_original>
// kernel: tpu_custom_call.1
$region0: #{tpu_custom_call.1}
  #allocation0 [shape = 'u32[]', space=smem, size = 0x4, offset = 0x4, fixed_abs, tag = 'smem constant byte address 0x4 - core index']
  #allocation1 [shape = 'u32[144,128]{1,0:T(1,128)}', space=vmem, size = 0x12000, scoped, tag = 'internal scratch']
  %s0 = inlined_call_operand.hbm [shape: f32[8,32], index: 0, kind: input, shape index: {}]
  %s1 = inlined_call_operand.hbm [shape: f32[8,32], index: 1, kind: input, shape index: {}]
  %s2 = inlined_call_operand.hbm [shape: f32[8,32], index: 2, kind: output, shape index: {}]
  %s3 = sld [smem:[#allocation0]]
  $region30: #{tpu_custom_call.1} parent=0
    _
  %s5 = ssub.s32 1, %s3
  %s6 = scalar_select 0, %s5, %s3
  $region1: #{tpu_custom_call.1} parent=0
    #allocation2 [shape = 'u8[4096]{0}', space=vmem, size = 0x1000, scoped, tag = 'input window, operand 0, single buffered']
    #allocation3 [shape = 's32[1]{0}', space=sflag, size = 0x4, scoped, tag = 'scoped memory for tpu_custom_call.1']
    #allocation4 [shape = 's32[1]{0}', space=sflag, size = 0x4, scoped, tag = 'scoped memory for tpu_custom_call.1']
    #allocation5 [shape = 'u8[4096]{0}', space=vmem, size = 0x1000, scoped, tag = 'input window, operand 1, single buffered']
    #allocation6 [shape = 's32[1]{0}', space=sflag, size = 0x4, scoped, tag = 'scoped memory for tpu_custom_call.1']
    #allocation7 [shape = 'u8[4096]{0}', space=vmem, size = 0x1000, scoped, tag = 'output window, operand 0, single buffered']
    %7 = vsyncpa [#allocation3], 0
    %8 = vsyncpa [#allocation6], 0
    %9 = vsyncpa [#allocation4], 0
    // Predicated region
    $region2: #{tpu_custom_call.1} parent=1 // pred_check
      _
    $region3: #{tpu_custom_call.1} parent=1 // pred_check_branch
      %11 = sbr.rel (0) target = $region5
    $region4: #{tpu_custom_call.1} parent=1 // pred_region
      %s12 = sadd.s32 0, 0
      %p13 = scmp.lt.s32.totalorder %s12, 0
      %s14 = scalar_select %p13, %s12, 0
      %s16 = ssub.s32 128, 128
      %17 = vsyncadd [#allocation3], %s16
      %s18 = smul.addr %s14, 128
      %s19 = scalar_lea.hbm %s0, %s18
      %s21 = sshll.u32 [#allocation2], 4
      %s22 = int_to_ptr.vmem [resolvable:$true] %s21
      %24 = dma.hbm_to_vmem [thread:$0]  %s19, 128, %s22, [#allocation3]
    $region5: #{tpu_custom_call.1} parent=1 // pred_fallthru
      _
    // Predicated region
    $region6: #{tpu_custom_call.1} parent=1 // pred_check
      _
    $region7: #{tpu_custom_call.1} parent=1 // pred_check_branch
      %26 = sbr.rel (0) target = $region9
    $region8: #{tpu_custom_call.1} parent=1 // pred_region
      %s27 = sadd.s32 0, 0
      %p28 = scmp.lt.s32.totalorder %s27, 0
      %s29 = scalar_select %p28, %s27, 0
      %s31 = ssub.s32 128, 128
      %32 = vsyncadd [#allocation6], %s31
      %s33 = smul.addr %s29, 128
      %s34 = scalar_lea.hbm %s1, %s33
      %s36 = sshll.u32 [#allocation5], 4
      %s37 = int_to_ptr.vmem [resolvable:$true] %s36
      %39 = dma.hbm_to_vmem [thread:$0]  %s34, 128, %s37, [#allocation6]
    $region9: #{tpu_custom_call.1} parent=1 // pred_fallthru
      _
    // Predicated region
    $region10: #{tpu_custom_call.1} parent=1 // pred_check
      _
    $region11: #{tpu_custom_call.1} parent=1 // pred_check_branch
      %41 = sbr.rel (0) target = $region13
    $region12: #{tpu_custom_call.1} parent=1 // pred_region
      %42 = dma.done [#allocation3], 128
    $region13: #{tpu_custom_call.1} parent=1 // pred_fallthru
      _
    // Predicated region
    $region14: #{tpu_custom_call.1} parent=1 // pred_check
      _
    $region15: #{tpu_custom_call.1} parent=1 // pred_check_branch
      %44 = sbr.rel (0) target = $region17
    $region16: #{tpu_custom_call.1} parent=1 // pred_region
      %45 = dma.done [#allocation6], 128
    $region17: #{tpu_custom_call.1} parent=1 // pred_fallthru
      _
    %s46 = sadd.s32 0, 0
    %p47 = scmp.lt.s32.totalorder %s46, 0
    %s48 = scalar_select %p47, %s46, 0
    %s49 = sadd.s32 0, 0
    %p50 = scmp.lt.s32.totalorder %s49, 0
    %s51 = scalar_select %p50, %s49, 0
    %p52 = scmp.eq.s32.totalorder 0, 0
    // Predicated region
    $region18: #{tpu_custom_call.1} parent=1 // pred_check
      %p53 = pneg %p52
    $region19: #{tpu_custom_call.1} parent=1 // pred_check_branch
      %55 = sbr.rel (%p53) target = $region21
    $region20: #{tpu_custom_call.1} parent=1 // pred_region
      %vm56 = vcmask 261120
      %57 = vst.msk [vmem:[#allocation7] sm:$0xff] %vm56, 0.0
    $region21: #{tpu_custom_call.1} parent=1 // pred_fallthru
      _
    %v58 = vld [vmem:[#allocation2] sm:$0xff]
    %v59 = vld [vmem:[#allocation5] sm:$0xff]
    %vm60 = vcmask 261120
    %v61 = vsel %vm60, %v58, -inf
    %62 = vmax.xlane.f32.xlu0 %v61
    %v63 = vpop.xlane.xlu0 %62
    %v64 = vsub.f32 %v58, %v63
    %v65 = vmul.f32 %v64, 1.442695
    %v66 = vpow.pop %v65
    %v67 = vsel %vm60, %v66, 0.0
    %68 = vadd.xlane.f32.xlu0 %v67
    %v69 = vpop.xlane.xlu0 %68
    %v70 = vlog2.pop %v69
    %v71 = vmul.f32 %v70, 0.6931472
    %v72 = vsub.f32 %v71, %v64
    %v73 = vmul.f32 %v59, %v72
    %v74 = vld [vmem:[#allocation7] sm:$0xff]
    %v75 = vadd.f32 %v74, %v73
    %76 = vst.msk [vmem:[#allocation7] sm:$0xff] %vm60, %v75
    // Predicated region
    $region22: #{tpu_custom_call.1} parent=1 // pred_check
      _
    $region23: #{tpu_custom_call.1} parent=1 // pred_check_branch
      %78 = sbr.rel (0) target = $region25
    $region24: #{tpu_custom_call.1} parent=1 // pred_region
      %s80 = ssub.s32 128, 128
      %81 = vsyncadd [#allocation4], %s80
      %s83 = sshll.u32 [#allocation7], 4
      %s84 = int_to_ptr.vmem [resolvable:$true] %s83
      %86 = dma.vmem_to_hbm [thread:$0]  %s84, 128, %s2, [#allocation4]
    $region25: #{tpu_custom_call.1} parent=1 // pred_fallthru
      _
    // Predicated region
    $region26: #{tpu_custom_call.1} parent=1 // pred_check
      _
    $region27: #{tpu_custom_call.1} parent=1 // pred_check_branch
      %88 = sbr.rel (0) target = $region29
    $region28: #{tpu_custom_call.1} parent=1 // pred_region
      %89 = dma.done [#allocation4], 128
    $region29: #{tpu_custom_call.1} parent=1 // pred_fallthru
      _
    %90 = vsyncpa [#allocation3], 1
    %91 = vsyncpa [#allocation6], 1
    %92 = vsyncpa [#allocation4], 1

</llo_original>
